<compile_context>
chip_gen: v7x
topology: tpu7x:2x2x1
jax: 0.10.0
libtpu: 0.0.40
codegen_flags: <defaults>
</compile_context>

<pallas_src>
import functools
import math

import jax
import jax.numpy as jnp
from jax.experimental import pallas as pl
from jax.experimental.pallas import tpu as pltpu

_INV_SQRT2 = 1.0 / math.sqrt(2.0)


def _round_up(a, b):
    return (a + b - 1) // b * b


def _round_down(a, b):
    return (a // b) * b


def _cdiv(a, b):
    return (a + b - 1) // b


def _gelu(h, approx_gelu):
    if approx_gelu:
        # tanh approximation: transcendental lands on the EUP slot (frees the VALU slot).
        return jax.nn.gelu(h, approximate=True)
    # exact erf GELU, matches torch.nn.GELU(approximate='none')
    return 0.5 * h * (1.0 + jax.lax.erf(h * _INV_SQRT2))


# ----------------------------------------------------------------------------- kernels
def _mlp_kernel(x_ref, w1_ref, b1_ref, w2_ref, b2_ref, o_ref, *, approx_gelu):
    # x_ref : (tm, Dp)  activation tile (original dtype, cast here)
    # w1_ref: (Dp, hdp) resident up-projection (transposed, zero-padded)
    # b1_ref: (1, hdp)  f32
    # w2_ref: (hdp, Dp) resident down-projection (transposed, zero-padded)
    # b2_ref: (1, Dp)   f32
    x = x_ref[...].astype(w1_ref.dtype)
    h = jnp.dot(x, w1_ref[...], preferred_element_type=jnp.float32) + b1_ref[...]
    h = _gelu(h, approx_gelu)
    o = jnp.dot(h.astype(w2_ref.dtype), w2_ref[...],
                preferred_element_type=jnp.float32) + b2_ref[...]
    o_ref[...] = o.astype(o_ref.dtype)


def _mlp_kernel_hd_chunked(x_ref, w1_ref, b1_ref, w2_ref, b2_ref, o_ref, acc_ref,
                           *, approx_gelu):
    # Inner "arbitrary" grid axis over hidden-dim chunks; f32 accumulator scratch.
    k = pl.program_id(1)

    @pl.when(k == 0)
    def _():
        acc_ref[...] = jnp.zeros_like(acc_ref)

    x = x_ref[...].astype(w1_ref.dtype)
    h = jnp.dot(x, w1_ref[...], preferred_element_type=jnp.float32) + b1_ref[...]
    h = _gelu(h, approx_gelu)
    acc_ref[...] += jnp.dot(h.astype(w2_ref.dtype), w2_ref[...],
                            preferred_element_type=jnp.float32)

    @pl.when(k == pl.num_programs(1) - 1)
    def _():
        o_ref[...] = (acc_ref[...] + b2_ref[...]).astype(o_ref.dtype)


# --------------------------------------------------------------------- hardware query
def _tpu_info():
    """(vmem_capacity_bytes, has_two_tensorcores, row_tile_alignment)."""
    vmem_cap = 64 << 20          # conservative default (v7x-sized)
    got_info = False
    try:
        vmem_cap = int(pltpu.get_tpu_info().vmem_capacity_bytes)
        got_info = True
    except Exception:
        pass
    kind = ""
    try:
        kind = jax.devices()[0].device_kind.lower()
    except Exception:
        pass
    row_align = 256              # v6e/v7x MXU pass is 256 rows
    if "v5 lite" in kind or "v5e" in kind or "v5lite" in kind:
        row_align = 128          # v5e MXU is 4x128^2
    multi_tc = ("v7" in kind) or ("7x" in kind) or (got_info and vmem_cap <= (72 << 20))
    return vmem_cap, multi_tc, row_align


# ------------------------------------------------------------- parameter preprocessing
def prepare_mlp_params(fc1_w, fc1_b, fc2_w, fc2_b, subset_hd, *,
                       matmul_dtype=jnp.bfloat16):
    """Hoisted weight slice/transpose/pad/cast. Call once per subset_hd, reuse across forwards.

    fc1_w: (H, D), fc1_b: (H,), fc2_w: (D, H), fc2_b: (D,).
    Zero padding of D / hd to multiples of 128 is numerically exact (padded W1 columns and
    b1 entries are zero, gelu(0)=0, padded W2 rows are zero).
    """
    H, D = fc1_w.shape
    hd = int(subset_hd)
    Dp = _round_up(D, 128)
    hdp = _round_up(hd, 128)
    w1_t = jnp.pad(fc1_w[:hd].T, ((0, Dp - D), (0, hdp - hd))).astype(matmul_dtype)
    w2_t = jnp.pad(fc2_w[:, :hd].T, ((0, hdp - hd), (0, Dp - D))).astype(matmul_dtype)
    b1 = jnp.pad(fc1_b[:hd], (0, hdp - hd)).reshape(1, hdp).astype(jnp.float32)
    b2 = jnp.pad(fc2_b, (0, Dp - D)).reshape(1, Dp).astype(jnp.float32)
    return {"w1_t": w1_t, "b1": b1, "w2_t": w2_t, "b2": b2,
            "D": D, "Dp": Dp, "hd": hd, "hdp": hdp, "matmul_dtype": matmul_dtype}


# ------------------------------------------------------------------------------ forward
def modified_vit_mlp_forward(x, params, *, tm=512, approx_gelu=False, force_hd_chunk=None):
    """x: (B, N, D). params: output of prepare_mlp_params."""
    B, N, D = x.shape
    assert D == params["D"], "x embed dim does not match prepared params"
    M = B * N
    Dp, hdp = params["Dp"], params["hdp"]
    w1_t, b1, w2_t, b2 = params["w1_t"], params["b1"], params["w2_t"], params["b2"]
    mm_dtype = params["matmul_dtype"]
    out_dtype = x.dtype

    x_bytes = jnp.dtype(x.dtype).itemsize
    w_bytes = jnp.dtype(mm_dtype).itemsize
    o_bytes = jnp.dtype(out_dtype).itemsize

    vmem_cap, multi_tc, row_align = _tpu_info()
    tile_budget = int(vmem_cap * 0.75)
    vmem_cap_limit = max(32 << 20, min(int(vmem_cap * 0.85), vmem_cap - (8 << 20)))

    # ---- row handling: stream boundary-clipped tiles for real M; pad only tiny M ----
    if M >= row_align:
        pad_rows = 0
        tm = max(row_align, _round_down(min(int(tm), M), row_align))
    else:
        pad_rows = _round_up(M, 8) - M
        tm = M + pad_rows
    rows = M + pad_rows

    def single_pass_vmem(t):
        weights = 2 * Dp * hdp * w_bytes          # both weights, resident + single-buffered
        x_tiles = 2 * t * Dp * x_bytes            # streamed activation tiles (double-buffered)
        o_tiles = 2 * t * Dp * o_bytes            # streamed output tiles
        hidden = t * hdp * (4 + w_bytes)          # f32 GELU temp + narrow copy for 2nd dot
        biases = (hdp + Dp) * 4
        return weights + x_tiles + o_tiles + hidden + biases

    def chunked_vmem(t, hk_):
        weights = 2 * 2 * Dp * hk_ * w_bytes      # streamed hd chunks, double-buffered
        x_tiles = 2 * t * Dp * x_bytes
        o_tiles = 2 * t * Dp * o_bytes
        acc = t * Dp * 4
        hidden = t * hk_ * (4 + w_bytes)
        biases = 2 * hk_ * 4 + Dp * 4
        return weights + x_tiles + o_tiles + acc + hidden + biases

    while tm > row_align and single_pass_vmem(tm) > tile_budget:
        tm = max(row_align, _round_down(tm // 2, row_align))

    grid_m = _cdiv(rows, tm)
    # Only v7x has 2 TensorCores sharing the parallel grid axis: give it >= 2 (even) steps.
    if multi_tc and grid_m < 2 and rows >= 2 * row_align:
        tm_even = _round_up(_cdiv(rows, 2), row_align)
        if tm_even <= rows and single_pass_vmem(tm_even) <= tile_budget:
            tm = tm_even
        else:
            tm = max(row_align, _round_down(tm // 2, row_align))
        grid_m = _cdiv(rows, tm)

    use_chunked = (force_hd_chunk is not None) or (single_pass_vmem(tm) > tile_budget)

    hk = hdp
    if use_chunked:
        if force_hd_chunk is not None:
            hk = min(hdp, _round_up(int(force_hd_chunk), 128))
        else:
            while hk > 128 and chunked_vmem(tm, hk) > tile_budget:
                hk = max(128, _round_up(hk // 2, 128))
        hdp_c = _round_up(hdp, hk)
        if hdp_c != hdp:
            # extra zero-padding of the hidden dim stays numerically exact
            w1_t = jnp.pad(w1_t, ((0, 0), (0, hdp_c - hdp)))
            w2_t = jnp.pad(w2_t, ((0, hdp_c - hdp), (0, 0)))
            b1 = jnp.pad(b1, ((0, 0), (0, hdp_c - hdp)))
            hdp = hdp_c
        grid_k = hdp // hk
        est = chunked_vmem(tm, hk)
    else:
        grid_k = 1
        est = single_pass_vmem(tm)

    vmem_limit = int(min(max(int(est * 1.25), 32 << 20), vmem_cap_limit))

    # ---- activations: no wrapper-side pad/cast HBM pass when the shape is already clean ----
    if Dp == D and pad_rows == 0:
        x2d = x.reshape(M, D)                     # cast to bf16 happens inside the kernel
    else:
        x2d = jnp.pad(x.reshape(M, D), ((0, pad_rows), (0, Dp - D)))

    def _run(single_buffer_resident):
        res_kw = {"pipeline_mode": pl.Buffered(1)} if single_buffer_resident else {}
        if use_chunked:
            kern = functools.partial(_mlp_kernel_hd_chunked, approx_gelu=approx_gelu)
            grid = (grid_m, grid_k)
            in_specs = [
                pl.BlockSpec((tm, Dp), lambda i, k: (i, 0)),      # x: invariant over k
                pl.BlockSpec((Dp, hk), lambda i, k: (0, k)),      # streamed w1 chunk
                pl.BlockSpec((1, hk), lambda i, k: (0, k)),       # streamed b1 chunk
                pl.BlockSpec((hk, Dp), lambda i, k: (k, 0)),      # streamed w2 chunk
                pl.BlockSpec((1, Dp), lambda i, k: (0, 0), **res_kw),
            ]
            out_specs = pl.BlockSpec((tm, Dp), lambda i, k: (i, 0))
            scratch = [pltpu.VMEM((tm, Dp), jnp.float32)]
            dims = ("parallel", "arbitrary")
        else:
            kern = functools.partial(_mlp_kernel, approx_gelu=approx_gelu)
            grid = (grid_m,)
            in_specs = [
                pl.BlockSpec((tm, Dp), lambda i: (i, 0)),         # streamed x tile
                pl.BlockSpec((Dp, hdp), lambda i: (0, 0), **res_kw),   # resident weights/biases
                pl.BlockSpec((1, hdp), lambda i: (0, 0), **res_kw),
                pl.BlockSpec((hdp, Dp), lambda i: (0, 0), **res_kw),
                pl.BlockSpec((1, Dp), lambda i: (0, 0), **res_kw),
            ]
            out_specs = pl.BlockSpec((tm, Dp), lambda i: (i, 0))
            scratch = []
            dims = ("parallel",)
        out = pl.pallas_call(
            kern,
            out_shape=jax.ShapeDtypeStruct((rows, Dp), out_dtype),
            grid_spec=pltpu.PrefetchScalarGridSpec(
                num_scalar_prefetch=0,
                grid=grid,
                in_specs=in_specs,
                out_specs=out_specs,
                scratch_shapes=scratch,
            ),
            compiler_params=pltpu.CompilerParams(
                dimension_semantics=dims,
                vmem_limit_bytes=vmem_limit),
        )(x2d, w1_t, b1, w2_t, b2)
        return jax.block_until_ready(out)

    try:
        out2d = _run(True)
    except Exception:
        # fall back to default double-buffering if single-buffered residents are rejected
        out2d = _run(False)

    if Dp == D and pad_rows == 0:
        return out2d.reshape(B, N, D)             # no extra slice pass in the clean case
    return out2d[:M, :D].reshape(B, N, D)


# ---------------------------------------------------------------------------- reference
def _reference_forward(x, fc1_w, fc1_b, fc2_w, fc2_b, subset_hd):
    up_w = fc1_w[:subset_hd]
    up_b = fc1_b[:subset_hd]
    dn_w = fc2_w[:, :subset_hd]
    h = jnp.einsum("bnd,hd->bnh", x, up_w) + up_b
    h = jax.nn.gelu(h, approximate=False)
    return jnp.einsum("bnh,dh->bnd", h, dn_w) + fc2_b


if __name__ == "__main__":
    keys = jax.random.split(jax.random.PRNGKey(0), 10)

    # Case 1: embed_dim=32, mlp_ratio=4 -> hidden=128; configure_subnetwork('m') with
    # scale_factors=[1/4, 1/2, 1] -> subset_hd=64.  N=9 makes M=18 (exercises row padding).
    B, N, D = 2, 9, 32
    hidden = D * 4
    subset_hd = hidden // 2                       # 'm' flag

    x = jax.random.normal(keys[0], (B, N, D), dtype=jnp.float32)
    fc1_w = jax.random.normal(keys[1], (hidden, D), dtype=jnp.float32) * 0.05
    fc1_b = jax.random.normal(keys[2], (hidden,), dtype=jnp.float32) * 0.05
    fc2_w = jax.random.normal(keys[3], (D, hidden), dtype=jnp.float32) * 0.05
    fc2_b = jax.random.normal(keys[4], (D,), dtype=jnp.float32) * 0.05

    params = prepare_mlp_params(fc1_w, fc1_b, fc2_w, fc2_b, subset_hd)  # hoisted: once per subset_hd
    out = jax.block_until_ready(modified_vit_mlp_forward(x, params))
    ref = _reference_forward(x, fc1_w, fc1_b, fc2_w, fc2_b, subset_hd)
    assert out.shape == (B, N, D)
    # bf16 MXU matmuls -> relaxed tolerance vs the f32 reference
    assert jnp.allclose(out, ref, atol=1e-2, rtol=1e-2), "single-pass kernel mismatch vs reference"

    # Case 2: exercise the hd-chunked accumulator path (inner 'arbitrary' grid axis).
    B2, N2, D2 = 2, 5, 64
    hidden2 = D2 * 4                              # 256
    subset_hd2 = hidden2                          # 'l' flag -> full hidden dim
    x2 = jax.random.normal(keys[5], (B2, N2, D2), dtype=jnp.float32)
    fc1_w2 = jax.random.normal(keys[6], (hidden2, D2), dtype=jnp.float32) * 0.05
    fc1_b2 = jax.random.normal(keys[7], (hidden2,), dtype=jnp.float32) * 0.05
    fc2_w2 = jax.random.normal(keys[8], (D2, hidden2), dtype=jnp.float32) * 0.05
    fc2_b2 = jax.random.normal(keys[9], (D2,), dtype=jnp.float32) * 0.05
    params2 = prepare_mlp_params(fc1_w2, fc1_b2, fc2_w2, fc2_b2, subset_hd2)
    out2 = jax.block_until_ready(
        modified_vit_mlp_forward(x2, params2, force_hd_chunk=128))
    ref2 = _reference_forward(x2, fc1_w2, fc1_b2, fc2_w2, fc2_b2, subset_hd2)
    assert jnp.allclose(out2, ref2, atol=1e-2, rtol=1e-2), "hd-chunked kernel mismatch vs reference"

    print("KERNEL_OK")
</pallas_src>

<mosaic_0001>
module attributes {stable_mosaic.version = 11 : i64} {
  func.func @_mlp_kernel(%arg0: i32, %arg1: memref<24x128xf32, #tpu.memory_space<vmem>>, %arg2: memref<128x128xbf16, #tpu.memory_space<vmem>>, %arg3: memref<1x128xf32, #tpu.memory_space<vmem>>, %arg4: memref<128x128xbf16, #tpu.memory_space<vmem>>, %arg5: memref<1x128xf32, #tpu.memory_space<vmem>>, %arg6: memref<24x128xf32, #tpu.memory_space<vmem>>) attributes {dimension_semantics = [#tpu.dimension_semantics<parallel>], iteration_bounds = array<i64: 1>, scalar_prefetch = 0 : i64, scratch_operands = 0 : i64, tpu.core_type = #tpu.core_type<tc>, window_params = [{transform_indices = @transform_0, window_bounds = array<i64: 24, 128>}, {pipeline_mode = #tpu.pipeline_mode<synchronous>, transform_indices = @transform_1, window_bounds = array<i64: 128, 128>}, {pipeline_mode = #tpu.pipeline_mode<synchronous>, transform_indices = @transform_2, window_bounds = array<i64: 1, 128>}, {pipeline_mode = #tpu.pipeline_mode<synchronous>, transform_indices = @transform_3, window_bounds = array<i64: 128, 128>}, {pipeline_mode = #tpu.pipeline_mode<synchronous>, transform_indices = @transform_4, window_bounds = array<i64: 1, 128>}, {transform_indices = @transform_5, window_bounds = array<i64: 24, 128>}]} {
    %c0 = arith.constant 0 : index
    %c0_0 = arith.constant 0 : index
    %0 = vector.load %arg1[%c0, %c0_0] : memref<24x128xf32, #tpu.memory_space<vmem>>, vector<24x128xf32>
    %1 = arith.truncf %0 : vector<24x128xf32> to vector<24x128xbf16>
    %c0_1 = arith.constant 0 : index
    %c0_2 = arith.constant 0 : index
    %2 = vector.load %arg2[%c0_1, %c0_2] : memref<128x128xbf16, #tpu.memory_space<vmem>>, vector<128x128xbf16>
    %cst = arith.constant dense<0.000000e+00> : vector<24x128xf32>
    %3 = tpu.matmul %1, %2, %cst {dimension_numbers = #tpu.dot_dimension_numbers<[1], [0], [0], [1], [0, 0, 1, 1], [], []>} : vector<24x128xbf16>, vector<128x128xbf16>, vector<24x128xf32> -> vector<24x128xf32>
    %c0_3 = arith.constant 0 : index
    %c0_4 = arith.constant 0 : index
    %4 = vector.load %arg3[%c0_3, %c0_4] : memref<1x128xf32, #tpu.memory_space<vmem>>, vector<1x128xf32>
    %5 = vector.broadcast %4 : vector<1x128xf32> to vector<24x128xf32>
    %6 = arith.addf %3, %5 : vector<24x128xf32>
    %cst_5 = arith.constant 5.000000e-01 : f32
    %7 = vector.broadcast %cst_5 : f32 to vector<24x128xf32>
    %8 = arith.mulf %7, %6 : vector<24x128xf32>
    %cst_6 = arith.constant 0.707106769 : f32
    %9 = vector.broadcast %cst_6 : f32 to vector<24x128xf32>
    %10 = arith.mulf %6, %9 : vector<24x128xf32>
    %11 = math.erf %10 : vector<24x128xf32>
    %cst_7 = arith.constant 1.000000e+00 : f32
    %12 = vector.broadcast %cst_7 : f32 to vector<24x128xf32>
    %13 = arith.addf %12, %11 : vector<24x128xf32>
    %14 = arith.mulf %8, %13 : vector<24x128xf32>
    %15 = arith.truncf %14 : vector<24x128xf32> to vector<24x128xbf16>
    %c0_8 = arith.constant 0 : index
    %c0_9 = arith.constant 0 : index
    %16 = vector.load %arg4[%c0_8, %c0_9] : memref<128x128xbf16, #tpu.memory_space<vmem>>, vector<128x128xbf16>
    %cst_10 = arith.constant dense<0.000000e+00> : vector<24x128xf32>
    %17 = tpu.matmul %15, %16, %cst_10 {dimension_numbers = #tpu.dot_dimension_numbers<[1], [0], [0], [1], [0, 0, 1, 1], [], []>} : vector<24x128xbf16>, vector<128x128xbf16>, vector<24x128xf32> -> vector<24x128xf32>
    %c0_11 = arith.constant 0 : index
    %c0_12 = arith.constant 0 : index
    %18 = vector.load %arg5[%c0_11, %c0_12] : memref<1x128xf32, #tpu.memory_space<vmem>>, vector<1x128xf32>
    %19 = vector.broadcast %18 : vector<1x128xf32> to vector<24x128xf32>
    %20 = arith.addf %17, %19 : vector<24x128xf32>
    %c0_13 = arith.constant 0 : index
    %c0_14 = arith.constant 0 : index
    %21 = vector.load %arg6[%c0_13, %c0_14] : memref<24x128xf32, #tpu.memory_space<vmem>>, vector<24x128xf32>
    tpu.vector_store %arg6[%c0_13, %c0_14], %20 {strides = array<i32>} : memref<24x128xf32, #tpu.memory_space<vmem>>, vector<24x128xf32>,
    return
  }
  func.func @transform_0(%arg0: i32) -> (i32, i32) {
    %c0_i32 = arith.constant 0 : i32
    %c0_i32_0 = arith.constant 0 : i32
    return %arg0, %c0_i32 : i32, i32
  }
  func.func @transform_1(%arg0: i32) -> (i32, i32) {
    %c0_i32 = arith.constant 0 : i32
    %c0_i32_0 = arith.constant 0 : i32
    %c0_i32_1 = arith.constant 0 : i32
    return %c0_i32, %c0_i32_0 : i32, i32
  }
  func.func @transform_2(%arg0: i32) -> (i32, i32) {
    %c0_i32 = arith.constant 0 : i32
    %c0_i32_0 = arith.constant 0 : i32
    %c0_i32_1 = arith.constant 0 : i32
    return %c0_i32, %c0_i32_0 : i32, i32
  }
  func.func @transform_3(%arg0: i32) -> (i32, i32) {
    %c0_i32 = arith.constant 0 : i32
    %c0_i32_0 = arith.constant 0 : i32
    %c0_i32_1 = arith.constant 0 : i32
    return %c0_i32, %c0_i32_0 : i32, i32
  }
  func.func @transform_4(%arg0: i32) -> (i32, i32) {
    %c0_i32 = arith.constant 0 : i32
    %c0_i32_0 = arith.constant 0 : i32
    %c0_i32_1 = arith.constant 0 : i32
    return %c0_i32, %c0_i32_0 : i32, i32
  }
  func.func @transform_5(%arg0: i32) -> (i32, i32) {
    %c0_i32 = arith.constant 0 : i32
    %c0_i32_0 = arith.constant 0 : i32
    return %arg0, %c0_i32 : i32, i32
  }
}

module attributes {stable_mosaic.version = 11 : i64} {
  func.func @_mlp_kernel(%arg0: i32, %arg1: memref<24x128xf32, #tpu.memory_space<vmem>>, %arg2: memref<128x128xbf16, #tpu.memory_space<vmem>>, %arg3: memref<1x128xf32, #tpu.memory_space<vmem>>, %arg4: memref<128x128xbf16, #tpu.memory_space<vmem>>, %arg5: memref<1x128xf32, #tpu.memory_space<vmem>>, %arg6: memref<24x128xf32, #tpu.memory_space<vmem>>) attributes {dimension_semantics = [#tpu.dimension_semantics<parallel>], iteration_bounds = array<i64: 1>, scalar_prefetch = 0 : i64, scratch_operands = 0 : i64, tpu.core_type = #tpu.core_type<tc>, window_params = [{transform_indices = @transform_0, window_bounds = array<i64: 24, 128>}, {pipeline_mode = #tpu.pipeline_mode<synchronous>, transform_indices = @transform_1, window_bounds = array<i64: 128, 128>}, {pipeline_mode = #tpu.pipeline_mode<synchronous>, transform_indices = @transform_2, window_bounds = array<i64: 1, 128>}, {pipeline_mode = #tpu.pipeline_mode<synchronous>, transform_indices = @transform_3, window_bounds = array<i64: 128, 128>}, {pipeline_mode = #tpu.pipeline_mode<synchronous>, transform_indices = @transform_4, window_bounds = array<i64: 1, 128>}, {transform_indices = @transform_5, window_bounds = array<i64: 24, 128>}]} {
    %c0 = arith.constant 0 : index
    %c0_0 = arith.constant 0 : index
    %0 = vector.load %arg1[%c0, %c0_0] : memref<24x128xf32, #tpu.memory_space<vmem>>, vector<24x128xf32>
    %1 = arith.truncf %0 : vector<24x128xf32> to vector<24x128xbf16>
    %c0_1 = arith.constant 0 : index
    %c0_2 = arith.constant 0 : index
    %2 = vector.load %arg2[%c0_1, %c0_2] : memref<128x128xbf16, #tpu.memory_space<vmem>>, vector<128x128xbf16>
    %cst = arith.constant dense<0.000000e+00> : vector<24x128xf32>
    %3 = tpu.matmul %1, %2, %cst {dimension_numbers = #tpu.dot_dimension_numbers<[1], [0], [0], [1], [0, 0, 1, 1], [], []>} : vector<24x128xbf16>, vector<128x128xbf16>, vector<24x128xf32> -> vector<24x128xf32>
    %c0_3 = arith.constant 0 : index
    %c0_4 = arith.constant 0 : index
    %4 = vector.load %arg3[%c0_3, %c0_4] : memref<1x128xf32, #tpu.memory_space<vmem>>, vector<1x128xf32>
    %5 = vector.broadcast %4 : vector<1x128xf32> to vector<24x128xf32>
    %6 = arith.addf %3, %5 : vector<24x128xf32>
    %cst_5 = arith.constant 5.000000e-01 : f32
    %7 = vector.broadcast %cst_5 : f32 to vector<24x128xf32>
    %8 = arith.mulf %7, %6 : vector<24x128xf32>
    %cst_6 = arith.constant 0.707106769 : f32
    %9 = vector.broadcast %cst_6 : f32 to vector<24x128xf32>
    %10 = arith.mulf %6, %9 : vector<24x128xf32>
    %11 = math.erf %10 : vector<24x128xf32>
    %cst_7 = arith.constant 1.000000e+00 : f32
    %12 = vector.broadcast %cst_7 : f32 to vector<24x128xf32>
    %13 = arith.addf %12, %11 : vector<24x128xf32>
    %14 = arith.mulf %8, %13 : vector<24x128xf32>
    %15 = arith.truncf %14 : vector<24x128xf32> to vector<24x128xbf16>
    %c0_8 = arith.constant 0 : index
    %c0_9 = arith.constant 0 : index
    %16 = vector.load %arg4[%c0_8, %c0_9] : memref<128x128xbf16, #tpu.memory_space<vmem>>, vector<128x128xbf16>
    %cst_10 = arith.constant dense<0.000000e+00> : vector<24x128xf32>
    %17 = tpu.matmul %15, %16, %cst_10 {dimension_numbers = #tpu.dot_dimension_numbers<[1], [0], [0], [1], [0, 0, 1, 1], [], []>} : vector<24x128xbf16>, vector<128x128xbf16>, vector<24x128xf32> -> vector<24x128xf32>
    %c0_11 = arith.constant 0 : index
    %c0_12 = arith.constant 0 : index
    %18 = vector.load %arg5[%c0_11, %c0_12] : memref<1x128xf32, #tpu.memory_space<vmem>>, vector<1x128xf32>
    %19 = vector.broadcast %18 : vector<1x128xf32> to vector<24x128xf32>
    %20 = arith.addf %17, %19 : vector<24x128xf32>
    %c0_13 = arith.constant 0 : index
    %c0_14 = arith.constant 0 : index
    %21 = vector.load %arg6[%c0_13, %c0_14] : memref<24x128xf32, #tpu.memory_space<vmem>>, vector<24x128xf32>
    tpu.vector_store %arg6[%c0_13, %c0_14], %20 {strides = array<i32>} : memref<24x128xf32, #tpu.memory_space<vmem>>, vector<24x128xf32>,
    return
  }
  func.func @transform_0(%arg0: i32) -> (i32, i32) {
    %c0_i32 = arith.constant 0 : i32
    %c0_i32_0 = arith.constant 0 : i32
    return %arg0, %c0_i32 : i32, i32
  }
  func.func @transform_1(%arg0: i32) -> (i32, i32) {
    %c0_i32 = arith.constant 0 : i32
    %c0_i32_0 = arith.constant 0 : i32
    %c0_i32_1 = arith.constant 0 : i32
    return %c0_i32, %c0_i32_0 : i32, i32
  }
  func.func @transform_2(%arg0: i32) -> (i32, i32) {
    %c0_i32 = arith.constant 0 : i32
    %c0_i32_0 = arith.constant 0 : i32
    %c0_i32_1 = arith.constant 0 : i32
    return %c0_i32, %c0_i32_0 : i32, i32
  }
  func.func @transform_3(%arg0: i32) -> (i32, i32) {
    %c0_i32 = arith.constant 0 : i32
    %c0_i32_0 = arith.constant 0 : i32
    %c0_i32_1 = arith.constant 0 : i32
    return %c0_i32, %c0_i32_0 : i32, i32
  }
  func.func @transform_4(%arg0: i32) -> (i32, i32) {
    %c0_i32 = arith.constant 0 : i32
    %c0_i32_0 = arith.constant 0 : i32
    %c0_i32_1 = arith.constant 0 : i32
    return %c0_i32, %c0_i32_0 : i32, i32
  }
  func.func @transform_5(%arg0: i32) -> (i32, i32) {
    %c0_i32 = arith.constant 0 : i32
    %c0_i32_0 = arith.constant 0 : i32
    return %arg0, %c0_i32 : i32, i32
  }
}

</mosaic_0001>

<llo_original>
// kernel: tpu_custom_call.1
$region0: #{tpu_custom_call.1}
  #allocation0 [shape = 'u32[]', space=smem, size = 0x4, offset = 0x4, fixed_abs, tag = 'smem constant byte address 0x4 - core index']
  #allocation1 [shape = 'u32[144,128]{1,0:T(1,128)}', space=vmem, size = 0x12000, scoped, tag = 'internal scratch']
  %s0 = inlined_call_operand.hbm [shape: f32[24,128], index: 0, kind: input, shape index: {}]
  %s1 = inlined_call_operand.hbm [shape: bf16[128,128], index: 1, kind: input, shape index: {}]
  %s2 = inlined_call_operand.vmem [shape: f32[1,128], index: 2, kind: input, shape index: {}]
  %s3 = inlined_call_operand.hbm [shape: bf16[128,128], index: 3, kind: input, shape index: {}]
  %s4 = inlined_call_operand.vmem [shape: f32[1,128], index: 4, kind: input, shape index: {}]
  %s5 = inlined_call_operand.hbm [shape: f32[24,128], index: 5, kind: output, shape index: {}]
  %s6 = sld [smem:[#allocation0]]
  $region42: #{tpu_custom_call.1} parent=0
    _
  %s8 = ssub.s32 1, %s6
  %s9 = scalar_select 0, %s8, %s6
  $region1: #{tpu_custom_call.1} parent=0
    #allocation2 [shape = 'u8[12288]{0}', space=vmem, size = 0x3000, scoped, tag = 'input window, operand 0, single buffered']
    #allocation3 [shape = 's32[1]{0}', space=sflag, size = 0x4, scoped, tag = 'scoped memory for tpu_custom_call.1']
    #allocation4 [shape = 's32[1]{0}', space=sflag, size = 0x4, scoped, tag = 'scoped memory for tpu_custom_call.1']
    #allocation5 [shape = 'u8[32768]{0}', space=vmem, size = 0x8000, scoped, tag = 'input window, operand 1, single buffered']
    #allocation6 [shape = 's32[1]{0}', space=sflag, size = 0x4, scoped, tag = 'scoped memory for tpu_custom_call.1']
    #allocation7 [shape = 'u8[32768]{0}', space=vmem, size = 0x8000, scoped, tag = 'input window, operand 3, single buffered']
    #allocation8 [shape = 'u8[12288]{0}', space=vmem, size = 0x3000, scoped, tag = 'output window, operand 0, single buffered']
    %10 = vsyncpa [#allocation3], 0
    %11 = vsyncpa [#allocation6], 0
    %12 = vsyncpa [#allocation4], 0
    // Predicated region
    $region2: #{tpu_custom_call.1} parent=1 // pred_check
      _
    $region3: #{tpu_custom_call.1} parent=1 // pred_check_branch
      %14 = sbr.rel (0) target = $region5
    $region4: #{tpu_custom_call.1} parent=1 // pred_region
      %s16 = ssub.s32 384, 384
      %17 = vsyncadd [#allocation3], %s16
      %s18 = sshll.u32 [#allocation2], 4
      %s19 = int_to_ptr.vmem [resolvable:$true] %s18
      %24 = dma.hbm_to_vmem [thread:$0]  %s0, 384, %s19, [#allocation3], 128, 128, 8
    $region5: #{tpu_custom_call.1} parent=1 // pred_fallthru
      _
    // Predicated region
    $region6: #{tpu_custom_call.1} parent=1 // pred_check
      _
    $region7: #{tpu_custom_call.1} parent=1 // pred_check_branch
      %26 = sbr.rel (0) target = $region9
    $region8: #{tpu_custom_call.1} parent=1 // pred_region
      %s28 = ssub.s32 1024, 1024
      %29 = vsyncadd [#allocation6], %s28
      %s30 = sshll.u32 [#allocation5], 4
      %s31 = int_to_ptr.vmem [resolvable:$true] %s30
      %36 = dma.hbm_to_vmem [thread:$0]  %s1, 1024, %s31, [#allocation6], 64, 64, 4
    $region9: #{tpu_custom_call.1} parent=1 // pred_fallthru
      _
    // Predicated region
    $region10: #{tpu_custom_call.1} parent=1 // pred_check
      _
    $region11: #{tpu_custom_call.1} parent=1 // pred_check_branch
      %38 = sbr.rel (0) target = $region13
    $region12: #{tpu_custom_call.1} parent=1 // pred_region
      _
    $region13: #{tpu_custom_call.1} parent=1 // pred_fallthru
      _
    // Predicated region
    $region14: #{tpu_custom_call.1} parent=1 // pred_check
      _
    $region15: #{tpu_custom_call.1} parent=1 // pred_check_branch
      %40 = sbr.rel (0) target = $region17
    $region16: #{tpu_custom_call.1} parent=1 // pred_region
      %s42 = ssub.s32 1024, 1024
      %43 = vsyncadd [#allocation6], %s42
      %s44 = sshll.u32 [#allocation7], 4
      %s45 = int_to_ptr.vmem [resolvable:$true] %s44
      %50 = dma.hbm_to_vmem [thread:$0]  %s3, 1024, %s45, [#allocation6], 64, 64, 4
    $region17: #{tpu_custom_call.1} parent=1 // pred_fallthru
      _
    // Predicated region
    $region18: #{tpu_custom_call.1} parent=1 // pred_check
      _
    $region19: #{tpu_custom_call.1} parent=1 // pred_check_branch
      %52 = sbr.rel (0) target = $region21
    $region20: #{tpu_custom_call.1} parent=1 // pred_region
      _
    $region21: #{tpu_custom_call.1} parent=1 // pred_fallthru
      _
    // Predicated region
    $region22: #{tpu_custom_call.1} parent=1 // pred_check
      _
    $region23: #{tpu_custom_call.1} parent=1 // pred_check_branch
      %54 = sbr.rel (0) target = $region25
    $region24: #{tpu_custom_call.1} parent=1 // pred_region
      %55 = dma.done [#allocation3], 384
    $region25: #{tpu_custom_call.1} parent=1 // pred_fallthru
      _
    // Predicated region
    $region26: #{tpu_custom_call.1} parent=1 // pred_check
      _
    $region27: #{tpu_custom_call.1} parent=1 // pred_check_branch
      %57 = sbr.rel (0) target = $region29
    $region28: #{tpu_custom_call.1} parent=1 // pred_region
      %58 = dma.done [#allocation6], 1024
    $region29: #{tpu_custom_call.1} parent=1 // pred_fallthru
      _
    // Predicated region
    $region30: #{tpu_custom_call.1} parent=1 // pred_check
      _
    $region31: #{tpu_custom_call.1} parent=1 // pred_check_branch
      %60 = sbr.rel (0) target = $region33
    $region32: #{tpu_custom_call.1} parent=1 // pred_region
      %61 = dma.done [#allocation6], 1024
    $region33: #{tpu_custom_call.1} parent=1 // pred_fallthru
      _
    %v63 = vld [vmem:[#allocation2] sm:$0xff]
    %v64 = vld [vmem:[#allocation2 + $0x8] sm:$0xff]
    %v65 = vld [vmem:[#allocation2 + $0x10] sm:$0xff]
    %v66 = vpack.c.bf16 %v64, %v63
    %v67 = vpack.c.bf16 %v65, %v65
    %v68 = vld [vmem:[#allocation5] sm:$0xf]
    %v69 = vld [vmem:[#allocation5 + $0x4] sm:$0xf]
    %v70 = vld [vmem:[#allocation5 + $0x8] sm:$0xf]
    %v71 = vld [vmem:[#allocation5 + $0xc] sm:$0xf]
    %v72 = vld [vmem:[#allocation5 + $0x10] sm:$0xf]
    %v73 = vld [vmem:[#allocation5 + $0x14] sm:$0xf]
    %v74 = vld [vmem:[#allocation5 + $0x18] sm:$0xf]
    %v75 = vld [vmem:[#allocation5 + $0x1c] sm:$0xf]
    %v76 = vld [vmem:[#allocation5 + $0x20] sm:$0xf]
    %v77 = vld [vmem:[#allocation5 + $0x24] sm:$0xf]
    %v78 = vld [vmem:[#allocation5 + $0x28] sm:$0xf]
    %v79 = vld [vmem:[#allocation5 + $0x2c] sm:$0xf]
    %v80 = vld [vmem:[#allocation5 + $0x30] sm:$0xf]
    %v81 = vld [vmem:[#allocation5 + $0x34] sm:$0xf]
    %v82 = vld [vmem:[#allocation5 + $0x38] sm:$0xf]
    %v83 = vld [vmem:[#allocation5 + $0x3c] sm:$0xf]
    %v84 = vld [vmem:[%s2] sm:$0x1]
    %v86 = vlaneseq
    %v87 = vshrl.u32 %v86, 7
    %v88 = vsub.s32 0, %v87
    %v89 = vrot.slane %v84, %v88
    %v107 = vunpack.c.l.b16 %v68
    %v108 = vunpack.c.l.b16 %v69
    %v109 = vunpack.c.l.b16 %v70
    %v110 = vunpack.c.l.b16 %v71
    %v111 = vunpack.c.l.b16 %v72
    %v112 = vunpack.c.l.b16 %v73
    %v113 = vunpack.c.l.b16 %v74
    %v114 = vunpack.c.l.b16 %v75
    %v115 = vunpack.c.l.b16 %v76
    %v116 = vunpack.c.l.b16 %v77
    %v117 = vunpack.c.l.b16 %v78
    %v118 = vunpack.c.l.b16 %v79
    %v119 = vunpack.c.l.b16 %v80
    %v120 = vunpack.c.l.b16 %v81
    %v121 = vunpack.c.l.b16 %v82
    %v122 = vunpack.c.l.b16 %v83
    %v123 = vpack.c.b16 %v108, %v107
    %v124 = vpack.c.b16 %v110, %v109
    %v125 = vpack.c.b16 %v112, %v111
    %v126 = vpack.c.b16 %v114, %v113
    %v127 = vpack.c.b16 %v116, %v115
    %v128 = vpack.c.b16 %v118, %v117
    %v129 = vpack.c.b16 %v120, %v119
    %v130 = vpack.c.b16 %v122, %v121
    %139 = vmatprep.subr.bf16.mxu0 0
    %140 = vmatpush1.bf16.msra.mxu0 %v123
    %141 = vmatprep.subr.bf16.mxu0 0
    %142 = vmatpush1.bf16.msra.mxu0 %v124
    %143 = vmatprep.subr.bf16.mxu0 0
    %144 = vmatpush1.bf16.msra.mxu0 %v125
    %145 = vmatprep.subr.bf16.mxu0 0
    %146 = vmatpush1.bf16.msra.mxu0 %v126
    %147 = vmatprep.subr.bf16.mxu0 0
    %148 = vmatpush1.bf16.msra.mxu0 %v127
    %149 = vmatprep.subr.bf16.mxu0 0
    %150 = vmatpush1.bf16.msra.mxu0 %v128
    %151 = vmatprep.subr.bf16.mxu0 0
    %152 = vmatpush1.bf16.msra.mxu0 %v129
    %153 = vmatprep.subr.bf16.mxu0 0
    %154 = vmatpush1.bf16.msra.mxu0 %v130
    %155 = vmatprep.subr.bf16.mxu0 0
    %156 = vmatpush1.bf16.msra.mxu0 0
    %157 = vmatprep.subr.bf16.mxu0 0
    %158 = vmatpush1.bf16.msra.mxu0 0
    %159 = vmatprep.subr.bf16.mxu0 0
    %160 = vmatpush1.bf16.msra.mxu0 0
    %161 = vmatprep.subr.bf16.mxu0 0
    %162 = vmatpush1.bf16.msra.mxu0 0
    %163 = vmatprep.subr.bf16.mxu0 0
    %164 = vmatpush1.bf16.msra.mxu0 0
    %165 = vmatprep.subr.bf16.mxu0 0
    %166 = vmatpush1.bf16.msra.mxu0 0
    %167 = vmatprep.subr.bf16.mxu0 0
    %168 = vmatpush1.bf16.msra.mxu0 0
    %169 = vmatprep.subr.bf16.mxu0 0
    %170 = vmatpush1.bf16.msra.mxu0 0
    %171 = vmatprep.mubr.bf16.mxu0 0
    %172 = vmatmul.mubr.bf16.gmra.mrb[0].mxu0 %v66
    %v173 = vpop.f32.mrb[0].mxu0
    %v174 = vadd.f32 %v89, %v173
    %v175 = vpop.f32.mrb[0].mxu0
    %v176 = vpop.f32.mrb[0].mxu0
    %v177 = vadd.f32 %v89, %v176
    %v178 = vpop.f32.mrb[0].mxu0
    %179 = vmatprep.mubr.bf16.mxu0 0
    %180 = vmatmul.mubr.bf16.gmra.mrb[0].mxu0 %v67
    %v181 = vpop.f32.mrb[0].mxu0
    %v182 = vadd.f32 %v89, %v181
    %v183 = vpop.f32.mrb[0].mxu0
    %v184 = vpop.f32.mrb[0].mxu0
    %v185 = vpop.f32.mrb[0].mxu0
    %186 = vdwg.mxu0
    %v187 = vmul.f32 %v174, 0.5
    %v188 = vmul.f32 %v177, 0.5
    %v189 = vmul.f32 %v182, 0.5
    %v190 = vmul.f32 %v174, 0.70710677
    %v191 = vmul.f32 %v177, 0.70710677
    %v192 = vmul.f32 %v182, 0.70710677
    %v193 = verf.f32.pop %v190
    %v194 = verf.f32.pop %v191
    %v195 = verf.f32.pop %v192
    %v196 = vadd.f32 %v193, 1.0
    %v197 = vadd.f32 %v194, 1.0
    %v198 = vadd.f32 %v195, 1.0
    %v199 = vmul.f32 %v187, %v196
    %v200 = vmul.f32 %v188, %v197
    %v201 = vmul.f32 %v189, %v198
    %v202 = vpack.c.bf16 %v200, %v199
    %v203 = vpack.c.bf16 %v201, %v201
    %v204 = vld [vmem:[#allocation7] sm:$0xf]
    %v205 = vld [vmem:[#allocation7 + $0x4] sm:$0xf]
    %v206 = vld [vmem:[#allocation7 + $0x8] sm:$0xf]
    %v207 = vld [vmem:[#allocation7 + $0xc] sm:$0xf]
    %v208 = vld [vmem:[#allocation7 + $0x10] sm:$0xf]
    %v209 = vld [vmem:[#allocation7 + $0x14] sm:$0xf]
    %v210 = vld [vmem:[#allocation7 + $0x18] sm:$0xf]
    %v211 = vld [vmem:[#allocation7 + $0x1c] sm:$0xf]
    %v212 = vld [vmem:[#allocation7 + $0x20] sm:$0xf]
    %v213 = vld [vmem:[#allocation7 + $0x24] sm:$0xf]
    %v214 = vld [vmem:[#allocation7 + $0x28] sm:$0xf]
    %v215 = vld [vmem:[#allocation7 + $0x2c] sm:$0xf]
    %v216 = vld [vmem:[#allocation7 + $0x30] sm:$0xf]
    %v217 = vld [vmem:[#allocation7 + $0x34] sm:$0xf]
    %v218 = vld [vmem:[#allocation7 + $0x38] sm:$0xf]
    %v219 = vld [vmem:[#allocation7 + $0x3c] sm:$0xf]
    %v220 = vld [vmem:[%s4] sm:$0x1]
    %v222 = vlaneseq
    %v223 = vshrl.u32 %v222, 7
    %v224 = vsub.s32 0, %v223
    %v225 = vrot.slane %v220, %v224
    %v243 = vunpack.c.l.b16 %v204
    %v244 = vunpack.c.l.b16 %v205
    %v245 = vunpack.c.l.b16 %v206
    %v246 = vunpack.c.l.b16 %v207
    %v247 = vunpack.c.l.b16 %v208
    %v248 = vunpack.c.l.b16 %v209
    %v249 = vunpack.c.l.b16 %v210
    %v250 = vunpack.c.l.b16 %v211
    %v251 = vunpack.c.l.b16 %v212
    %v252 = vunpack.c.l.b16 %v213
    %v253 = vunpack.c.l.b16 %v214
    %v254 = vunpack.c.l.b16 %v215
    %v255 = vunpack.c.l.b16 %v216
    %v256 = vunpack.c.l.b16 %v217
    %v257 = vunpack.c.l.b16 %v218
    %v258 = vunpack.c.l.b16 %v219
    %v259 = vpack.c.b16 %v244, %v243
    %v260 = vpack.c.b16 %v246, %v245
    %v261 = vpack.c.b16 %v248, %v247
    %v262 = vpack.c.b16 %v250, %v249
    %v263 = vpack.c.b16 %v252, %v251
    %v264 = vpack.c.b16 %v254, %v253
    %v265 = vpack.c.b16 %v256, %v255
    %v266 = vpack.c.b16 %v258, %v257
    %275 = vmatprep.subr.bf16.mxu0 0
    %276 = vmatpush1.bf16.msra.mxu0 %v259
    %277 = vmatprep.subr.bf16.mxu0 0
    %278 = vmatpush1.bf16.msra.mxu0 %v260
    %279 = vmatprep.subr.bf16.mxu0 0
    %280 = vmatpush1.bf16.msra.mxu0 %v261
    %281 = vmatprep.subr.bf16.mxu0 0
    %282 = vmatpush1.bf16.msra.mxu0 %v262
    %283 = vmatprep.subr.bf16.mxu0 0
    %284 = vmatpush1.bf16.msra.mxu0 %v263
    %285 = vmatprep.subr.bf16.mxu0 0
    %286 = vmatpush1.bf16.msra.mxu0 %v264
    %287 = vmatprep.subr.bf16.mxu0 0
    %288 = vmatpush1.bf16.msra.mxu0 %v265
    %289 = vmatprep.subr.bf16.mxu0 0
    %290 = vmatpush1.bf16.msra.mxu0 %v266
    %291 = vmatprep.subr.bf16.mxu0 0
    %292 = vmatpush1.bf16.msra.mxu0 0
    %293 = vmatprep.subr.bf16.mxu0 0
    %294 = vmatpush1.bf16.msra.mxu0 0
    %295 = vmatprep.subr.bf16.mxu0 0
    %296 = vmatpush1.bf16.msra.mxu0 0
    %297 = vmatprep.subr.bf16.mxu0 0
    %298 = vmatpush1.bf16.msra.mxu0 0
    %299 = vmatprep.subr.bf16.mxu0 0
    %300 = vmatpush1.bf16.msra.mxu0 0
    %301 = vmatprep.subr.bf16.mxu0 0
    %302 = vmatpush1.bf16.msra.mxu0 0
    %303 = vmatprep.subr.bf16.mxu0 0
    %304 = vmatpush1.bf16.msra.mxu0 0
    %305 = vmatprep.subr.bf16.mxu0 0
    %306 = vmatpush1.bf16.msra.mxu0 0
    %307 = vmatprep.mubr.bf16.mxu0 0
    %308 = vmatmul.mubr.bf16.gmra.mrb[0].mxu0 %v202
    %v309 = vpop.f32.mrb[0].mxu0
    %v310 = vadd.f32 %v225, %v309
    %v311 = vpop.f32.mrb[0].mxu0
    %v312 = vpop.f32.mrb[0].mxu0
    %v313 = vadd.f32 %v225, %v312
    %v314 = vpop.f32.mrb[0].mxu0
    %315 = vmatprep.mubr.bf16.mxu0 0
    %316 = vmatmul.mubr.bf16.gmra.mrb[0].mxu0 %v203
    %v317 = vpop.f32.mrb[0].mxu0
    %v318 = vadd.f32 %v225, %v317
    %v319 = vpop.f32.mrb[0].mxu0
    %v320 = vpop.f32.mrb[0].mxu0
    %v321 = vpop.f32.mrb[0].mxu0
    %322 = vdwg.mxu0
    %323 = vst [vmem:[#allocation8] sm:$0xff] %v310
    %324 = vst [vmem:[#allocation8 + $0x8] sm:$0xff] %v313
    %325 = vst [vmem:[#allocation8 + $0x10] sm:$0xff] %v318
    // Predicated region
    $region34: #{tpu_custom_call.1} parent=1 // pred_check
      _
    $region35: #{tpu_custom_call.1} parent=1 // pred_check_branch
      %327 = sbr.rel (0) target = $region37
    $region36: #{tpu_custom_call.1} parent=1 // pred_region
      %s329 = ssub.s32 384, 384
      %330 = vsyncadd [#allocation4], %s329
      %s331 = sshll.u32 [#allocation8], 4
      %s332 = int_to_ptr.vmem [resolvable:$true] %s331
      %337 = dma.vmem_to_hbm [thread:$0]  %s332, 384, %s5, [#allocation4], 128, 128, 8
    $region37: #{tpu_custom_call.1} parent=1 // pred_fallthru
      _
    // Predicated region
    $region38: #{tpu_custom_call.1} parent=1 // pred_check
      _
    $region39: #{tpu_custom_call.1} parent=1 // pred_check_branch
      %339 = sbr.rel (0) target = $region41
    $region40: #{tpu_custom_call.1} parent=1 // pred_region
      %340 = dma.done [#allocation4], 384
    $region41: #{tpu_custom_call.1} parent=1 // pred_fallthru
      _
    %341 = vsyncpa [#allocation3], 1
    %342 = vsyncpa [#allocation6], 1
    %343 = vsyncpa [#allocation4], 1

// kernel: tpu_custom_call.1
$region0: #{tpu_custom_call.1}
  #allocation0 [shape = 'u32[]', space=smem, size = 0x4, offset = 0x4, fixed_abs, tag = 'smem constant byte address 0x4 - core index']
  #allocation1 [shape = 'u32[144,128]{1,0:T(1,128)}', space=vmem, size = 0x12000, scoped, tag = 'internal scratch']
  %s0 = inlined_call_operand.hbm [shape: f32[24,128], index: 0, kind: input, shape index: {}]
  %s1 = inlined_call_operand.hbm [shape: bf16[128,128], index: 1, kind: input, shape index: {}]
  %s2 = inlined_call_operand.vmem [shape: f32[1,128], index: 2, kind: input, shape index: {}]
  %s3 = inlined_call_operand.hbm [shape: bf16[128,128], index: 3, kind: input, shape index: {}]
  %s4 = inlined_call_operand.vmem [shape: f32[1,128], index: 4, kind: input, shape index: {}]
  %s5 = inlined_call_operand.hbm [shape: f32[24,128], index: 5, kind: output, shape index: {}]
  %s6 = sld [smem:[#allocation0]]
  $region42: #{tpu_custom_call.1} parent=0
    _
  %s8 = ssub.s32 1, %s6
  %s9 = scalar_select 0, %s8, %s6
  $region1: #{tpu_custom_call.1} parent=0
    #allocation2 [shape = 'u8[12288]{0}', space=vmem, size = 0x3000, scoped, tag = 'input window, operand 0, single buffered']
    #allocation3 [shape = 's32[1]{0}', space=sflag, size = 0x4, scoped, tag = 'scoped memory for tpu_custom_call.1']
    #allocation4 [shape = 's32[1]{0}', space=sflag, size = 0x4, scoped, tag = 'scoped memory for tpu_custom_call.1']
    #allocation5 [shape = 'u8[32768]{0}', space=vmem, size = 0x8000, scoped, tag = 'input window, operand 1, single buffered']
    #allocation6 [shape = 's32[1]{0}', space=sflag, size = 0x4, scoped, tag = 'scoped memory for tpu_custom_call.1']
    #allocation7 [shape = 'u8[32768]{0}', space=vmem, size = 0x8000, scoped, tag = 'input window, operand 3, single buffered']
    #allocation8 [shape = 'u8[12288]{0}', space=vmem, size = 0x3000, scoped, tag = 'output window, operand 0, single buffered']
    %10 = vsyncpa [#allocation3], 0
    %11 = vsyncpa [#allocation6], 0
    %12 = vsyncpa [#allocation4], 0
    // Predicated region
    $region2: #{tpu_custom_call.1} parent=1 // pred_check
      _
    $region3: #{tpu_custom_call.1} parent=1 // pred_check_branch
      %14 = sbr.rel (0) target = $region5
    $region4: #{tpu_custom_call.1} parent=1 // pred_region
      %s16 = ssub.s32 384, 384
      %17 = vsyncadd [#allocation3], %s16
      %s18 = sshll.u32 [#allocation2], 4
      %s19 = int_to_ptr.vmem [resolvable:$true] %s18
      %24 = dma.hbm_to_vmem [thread:$0]  %s0, 384, %s19, [#allocation3], 128, 128, 8
    $region5: #{tpu_custom_call.1} parent=1 // pred_fallthru
      _
    // Predicated region
    $region6: #{tpu_custom_call.1} parent=1 // pred_check
      _
    $region7: #{tpu_custom_call.1} parent=1 // pred_check_branch
      %26 = sbr.rel (0) target = $region9
    $region8: #{tpu_custom_call.1} parent=1 // pred_region
      %s28 = ssub.s32 1024, 1024
      %29 = vsyncadd [#allocation6], %s28
      %s30 = sshll.u32 [#allocation5], 4
      %s31 = int_to_ptr.vmem [resolvable:$true] %s30
      %36 = dma.hbm_to_vmem [thread:$0]  %s1, 1024, %s31, [#allocation6], 64, 64, 4
    $region9: #{tpu_custom_call.1} parent=1 // pred_fallthru
      _
    // Predicated region
    $region10: #{tpu_custom_call.1} parent=1 // pred_check
      _
    $region11: #{tpu_custom_call.1} parent=1 // pred_check_branch
      %38 = sbr.rel (0) target = $region13
    $region12: #{tpu_custom_call.1} parent=1 // pred_region
      _
    $region13: #{tpu_custom_call.1} parent=1 // pred_fallthru
      _
    // Predicated region
    $region14: #{tpu_custom_call.1} parent=1 // pred_check
      _
    $region15: #{tpu_custom_call.1} parent=1 // pred_check_branch
      %40 = sbr.rel (0) target = $region17
    $region16: #{tpu_custom_call.1} parent=1 // pred_region
      %s42 = ssub.s32 1024, 1024
      %43 = vsyncadd [#allocation6], %s42
      %s44 = sshll.u32 [#allocation7], 4
      %s45 = int_to_ptr.vmem [resolvable:$true] %s44
      %50 = dma.hbm_to_vmem [thread:$0]  %s3, 1024, %s45, [#allocation6], 64, 64, 4
    $region17: #{tpu_custom_call.1} parent=1 // pred_fallthru
      _
    // Predicated region
    $region18: #{tpu_custom_call.1} parent=1 // pred_check
      _
    $region19: #{tpu_custom_call.1} parent=1 // pred_check_branch
      %52 = sbr.rel (0) target = $region21
    $region20: #{tpu_custom_call.1} parent=1 // pred_region
      _
    $region21: #{tpu_custom_call.1} parent=1 // pred_fallthru
      _
    // Predicated region
    $region22: #{tpu_custom_call.1} parent=1 // pred_check
      _
    $region23: #{tpu_custom_call.1} parent=1 // pred_check_branch
      %54 = sbr.rel (0) target = $region25
    $region24: #{tpu_custom_call.1} parent=1 // pred_region
      %55 = dma.done [#allocation3], 384
    $region25: #{tpu_custom_call.1} parent=1 // pred_fallthru
      _
    // Predicated region
    $region26: #{tpu_custom_call.1} parent=1 // pred_check
      _
    $region27: #{tpu_custom_call.1} parent=1 // pred_check_branch
      %57 = sbr.rel (0) target = $region29
    $region28: #{tpu_custom_call.1} parent=1 // pred_region
      %58 = dma.done [#allocation6], 1024
    $region29: #{tpu_custom_call.1} parent=1 // pred_fallthru
      _
    // Predicated region
    $region30: #{tpu_custom_call.1} parent=1 // pred_check
      _
    $region31: #{tpu_custom_call.1} parent=1 // pred_check_branch
      %60 = sbr.rel (0) target = $region33
    $region32: #{tpu_custom_call.1} parent=1 // pred_region
      %61 = dma.done [#allocation6], 1024
    $region33: #{tpu_custom_call.1} parent=1 // pred_fallthru
      _
    %v63 = vld [vmem:[#allocation2] sm:$0xff]
    %v64 = vld [vmem:[#allocation2 + $0x8] sm:$0xff]
    %v65 = vld [vmem:[#allocation2 + $0x10] sm:$0xff]
    %v66 = vpack.c.bf16 %v64, %v63
    %v67 = vpack.c.bf16 %v65, %v65
    %v68 = vld [vmem:[#allocation5] sm:$0xf]
    %v69 = vld [vmem:[#allocation5 + $0x4] sm:$0xf]
    %v70 = vld [vmem:[#allocation5 + $0x8] sm:$0xf]
    %v71 = vld [vmem:[#allocation5 + $0xc] sm:$0xf]
    %v72 = vld [vmem:[#allocation5 + $0x10] sm:$0xf]
    %v73 = vld [vmem:[#allocation5 + $0x14] sm:$0xf]
    %v74 = vld [vmem:[#allocation5 + $0x18] sm:$0xf]
    %v75 = vld [vmem:[#allocation5 + $0x1c] sm:$0xf]
    %v76 = vld [vmem:[#allocation5 + $0x20] sm:$0xf]
    %v77 = vld [vmem:[#allocation5 + $0x24] sm:$0xf]
    %v78 = vld [vmem:[#allocation5 + $0x28] sm:$0xf]
    %v79 = vld [vmem:[#allocation5 + $0x2c] sm:$0xf]
    %v80 = vld [vmem:[#allocation5 + $0x30] sm:$0xf]
    %v81 = vld [vmem:[#allocation5 + $0x34] sm:$0xf]
    %v82 = vld [vmem:[#allocation5 + $0x38] sm:$0xf]
    %v83 = vld [vmem:[#allocation5 + $0x3c] sm:$0xf]
    %v84 = vld [vmem:[%s2] sm:$0x1]
    %v86 = vlaneseq
    %v87 = vshrl.u32 %v86, 7
    %v88 = vsub.s32 0, %v87
    %v89 = vrot.slane %v84, %v88
    %v107 = vunpack.c.l.b16 %v68
    %v108 = vunpack.c.l.b16 %v69
    %v109 = vunpack.c.l.b16 %v70
    %v110 = vunpack.c.l.b16 %v71
    %v111 = vunpack.c.l.b16 %v72
    %v112 = vunpack.c.l.b16 %v73
    %v113 = vunpack.c.l.b16 %v74
    %v114 = vunpack.c.l.b16 %v75
    %v115 = vunpack.c.l.b16 %v76
    %v116 = vunpack.c.l.b16 %v77
    %v117 = vunpack.c.l.b16 %v78
    %v118 = vunpack.c.l.b16 %v79
    %v119 = vunpack.c.l.b16 %v80
    %v120 = vunpack.c.l.b16 %v81
    %v121 = vunpack.c.l.b16 %v82
    %v122 = vunpack.c.l.b16 %v83
    %v123 = vpack.c.b16 %v108, %v107
    %v124 = vpack.c.b16 %v110, %v109
    %v125 = vpack.c.b16 %v112, %v111
    %v126 = vpack.c.b16 %v114, %v113
    %v127 = vpack.c.b16 %v116, %v115
    %v128 = vpack.c.b16 %v118, %v117
    %v129 = vpack.c.b16 %v120, %v119
    %v130 = vpack.c.b16 %v122, %v121
    %139 = vmatprep.subr.bf16.mxu0 0
    %140 = vmatpush1.bf16.msra.mxu0 %v123
    %141 = vmatprep.subr.bf16.mxu0 0
    %142 = vmatpush1.bf16.msra.mxu0 %v124
    %143 = vmatprep.subr.bf16.mxu0 0
    %144 = vmatpush1.bf16.msra.mxu0 %v125
    %145 = vmatprep.subr.bf16.mxu0 0
    %146 = vmatpush1.bf16.msra.mxu0 %v126
    %147 = vmatprep.subr.bf16.mxu0 0
    %148 = vmatpush1.bf16.msra.mxu0 %v127
    %149 = vmatprep.subr.bf16.mxu0 0
    %150 = vmatpush1.bf16.msra.mxu0 %v128
    %151 = vmatprep.subr.bf16.mxu0 0
    %152 = vmatpush1.bf16.msra.mxu0 %v129
    %153 = vmatprep.subr.bf16.mxu0 0
    %154 = vmatpush1.bf16.msra.mxu0 %v130
    %155 = vmatprep.subr.bf16.mxu0 0
    %156 = vmatpush1.bf16.msra.mxu0 0
    %157 = vmatprep.subr.bf16.mxu0 0
    %158 = vmatpush1.bf16.msra.mxu0 0
    %159 = vmatprep.subr.bf16.mxu0 0
    %160 = vmatpush1.bf16.msra.mxu0 0
    %161 = vmatprep.subr.bf16.mxu0 0
    %162 = vmatpush1.bf16.msra.mxu0 0
    %163 = vmatprep.subr.bf16.mxu0 0
    %164 = vmatpush1.bf16.msra.mxu0 0
    %165 = vmatprep.subr.bf16.mxu0 0
    %166 = vmatpush1.bf16.msra.mxu0 0
    %167 = vmatprep.subr.bf16.mxu0 0
    %168 = vmatpush1.bf16.msra.mxu0 0
    %169 = vmatprep.subr.bf16.mxu0 0
    %170 = vmatpush1.bf16.msra.mxu0 0
    %171 = vmatprep.mubr.bf16.mxu0 0
    %172 = vmatmul.mubr.bf16.gmra.mrb[0].mxu0 %v66
    %v173 = vpop.f32.mrb[0].mxu0
    %v174 = vadd.f32 %v89, %v173
    %v175 = vpop.f32.mrb[0].mxu0
    %v176 = vpop.f32.mrb[0].mxu0
    %v177 = vadd.f32 %v89, %v176
    %v178 = vpop.f32.mrb[0].mxu0
    %179 = vmatprep.mubr.bf16.mxu0 0
    %180 = vmatmul.mubr.bf16.gmra.mrb[0].mxu0 %v67
    %v181 = vpop.f32.mrb[0].mxu0
    %v182 = vadd.f32 %v89, %v181
    %v183 = vpop.f32.mrb[0].mxu0
    %v184 = vpop.f32.mrb[0].mxu0
    %v185 = vpop.f32.mrb[0].mxu0
    %186 = vdwg.mxu0
    %v187 = vmul.f32 %v174, 0.5
    %v188 = vmul.f32 %v177, 0.5
    %v189 = vmul.f32 %v182, 0.5
    %v190 = vmul.f32 %v174, 0.70710677
    %v191 = vmul.f32 %v177, 0.70710677
    %v192 = vmul.f32 %v182, 0.70710677
    %v193 = verf.f32.pop %v190
    %v194 = verf.f32.pop %v191
    %v195 = verf.f32.pop %v192
    %v196 = vadd.f32 %v193, 1.0
    %v197 = vadd.f32 %v194, 1.0
    %v198 = vadd.f32 %v195, 1.0
    %v199 = vmul.f32 %v187, %v196
    %v200 = vmul.f32 %v188, %v197
    %v201 = vmul.f32 %v189, %v198
    %v202 = vpack.c.bf16 %v200, %v199
    %v203 = vpack.c.bf16 %v201, %v201
    %v204 = vld [vmem:[#allocation7] sm:$0xf]
    %v205 = vld [vmem:[#allocation7 + $0x4] sm:$0xf]
    %v206 = vld [vmem:[#allocation7 + $0x8] sm:$0xf]
    %v207 = vld [vmem:[#allocation7 + $0xc] sm:$0xf]
    %v208 = vld [vmem:[#allocation7 + $0x10] sm:$0xf]
    %v209 = vld [vmem:[#allocation7 + $0x14] sm:$0xf]
    %v210 = vld [vmem:[#allocation7 + $0x18] sm:$0xf]
    %v211 = vld [vmem:[#allocation7 + $0x1c] sm:$0xf]
    %v212 = vld [vmem:[#allocation7 + $0x20] sm:$0xf]
    %v213 = vld [vmem:[#allocation7 + $0x24] sm:$0xf]
    %v214 = vld [vmem:[#allocation7 + $0x28] sm:$0xf]
    %v215 = vld [vmem:[#allocation7 + $0x2c] sm:$0xf]
    %v216 = vld [vmem:[#allocation7 + $0x30] sm:$0xf]
    %v217 = vld [vmem:[#allocation7 + $0x34] sm:$0xf]
    %v218 = vld [vmem:[#allocation7 + $0x38] sm:$0xf]
    %v219 = vld [vmem:[#allocation7 + $0x3c] sm:$0xf]
    %v220 = vld [vmem:[%s4] sm:$0x1]
    %v222 = vlaneseq
    %v223 = vshrl.u32 %v222, 7
    %v224 = vsub.s32 0, %v223
    %v225 = vrot.slane %v220, %v224
    %v243 = vunpack.c.l.b16 %v204
    %v244 = vunpack.c.l.b16 %v205
    %v245 = vunpack.c.l.b16 %v206
    %v246 = vunpack.c.l.b16 %v207
    %v247 = vunpack.c.l.b16 %v208
    %v248 = vunpack.c.l.b16 %v209
    %v249 = vunpack.c.l.b16 %v210
    %v250 = vunpack.c.l.b16 %v211
    %v251 = vunpack.c.l.b16 %v212
    %v252 = vunpack.c.l.b16 %v213
    %v253 = vunpack.c.l.b16 %v214
    %v254 = vunpack.c.l.b16 %v215
    %v255 = vunpack.c.l.b16 %v216
    %v256 = vunpack.c.l.b16 %v217
    %v257 = vunpack.c.l.b16 %v218
    %v258 = vunpack.c.l.b16 %v219
    %v259 = vpack.c.b16 %v244, %v243
    %v260 = vpack.c.b16 %v246, %v245
    %v261 = vpack.c.b16 %v248, %v247
    %v262 = vpack.c.b16 %v250, %v249
    %v263 = vpack.c.b16 %v252, %v251
    %v264 = vpack.c.b16 %v254, %v253
    %v265 = vpack.c.b16 %v256, %v255
    %v266 = vpack.c.b16 %v258, %v257
    %275 = vmatprep.subr.bf16.mxu0 0
    %276 = vmatpush1.bf16.msra.mxu0 %v259
    %277 = vmatprep.subr.bf16.mxu0 0
    %278 = vmatpush1.bf16.msra.mxu0 %v260
    %279 = vmatprep.subr.bf16.mxu0 0
    %280 = vmatpush1.bf16.msra.mxu0 %v261
    %281 = vmatprep.subr.bf16.mxu0 0
    %282 = vmatpush1.bf16.msra.mxu0 %v262
    %283 = vmatprep.subr.bf16.mxu0 0
    %284 = vmatpush1.bf16.msra.mxu0 %v263
    %285 = vmatprep.subr.bf16.mxu0 0
    %286 = vmatpush1.bf16.msra.mxu0 %v264
    %287 = vmatprep.subr.bf16.mxu0 0
    %288 = vmatpush1.bf16.msra.mxu0 %v265
    %289 = vmatprep.subr.bf16.mxu0 0
    %290 = vmatpush1.bf16.msra.mxu0 %v266
    %291 = vmatprep.subr.bf16.mxu0 0
    %292 = vmatpush1.bf16.msra.mxu0 0
    %293 = vmatprep.subr.bf16.mxu0 0
    %294 = vmatpush1.bf16.msra.mxu0 0
    %295 = vmatprep.subr.bf16.mxu0 0
    %296 = vmatpush1.bf16.msra.mxu0 0
    %297 = vmatprep.subr.bf16.mxu0 0
    %298 = vmatpush1.bf16.msra.mxu0 0
    %299 = vmatprep.subr.bf16.mxu0 0
    %300 = vmatpush1.bf16.msra.mxu0 0
    %301 = vmatprep.subr.bf16.mxu0 0
    %302 = vmatpush1.bf16.msra.mxu0 0
    %303 = vmatprep.subr.bf16.mxu0 0
    %304 = vmatpush1.bf16.msra.mxu0 0
    %305 = vmatprep.subr.bf16.mxu0 0
    %306 = vmatpush1.bf16.msra.mxu0 0
    %307 = vmatprep.mubr.bf16.mxu0 0
    %308 = vmatmul.mubr.bf16.gmra.mrb[0].mxu0 %v202
    %v309 = vpop.f32.mrb[0].mxu0
    %v310 = vadd.f32 %v225, %v309
    %v311 = vpop.f32.mrb[0].mxu0
    %v312 = vpop.f32.mrb[0].mxu0
    %v313 = vadd.f32 %v225, %v312
    %v314 = vpop.f32.mrb[0].mxu0
    %315 = vmatprep.mubr.bf16.mxu0 0
    %316 = vmatmul.mubr.bf16.gmra.mrb[0].mxu0 %v203
    %v317 = vpop.f32.mrb[0].mxu0
    %v318 = vadd.f32 %v225, %v317
    %v319 = vpop.f32.mrb[0].mxu0
    %v320 = vpop.f32.mrb[0].mxu0
    %v321 = vpop.f32.mrb[0].mxu0
    %322 = vdwg.mxu0
    %323 = vst [vmem:[#allocation8] sm:$0xff] %v310
    %324 = vst [vmem:[#allocation8 + $0x8] sm:$0xff] %v313
    %325 = vst [vmem:[#allocation8 + $0x10] sm:$0xff] %v318
    // Predicated region
    $region34: #{tpu_custom_call.1} parent=1 // pred_check
      _
    $region35: #{tpu_custom_call.1} parent=1 // pred_check_branch
      %327 = sbr.rel (0) target = $region37
    $region36: #{tpu_custom_call.1} parent=1 // pred_region
      %s329 = ssub.s32 384, 384
      %330 = vsyncadd [#allocation4], %s329
      %s331 = sshll.u32 [#allocation8], 4
      %s332 = int_to_ptr.vmem [resolvable:$true] %s331
      %337 = dma.vmem_to_hbm [thread:$0]  %s332, 384, %s5, [#allocation4], 128, 128, 8
    $region37: #{tpu_custom_call.1} parent=1 // pred_fallthru
      _
    // Predicated region
    $region38: #{tpu_custom_call.1} parent=1 // pred_check
      _
    $region39: #{tpu_custom_call.1} parent=1 // pred_check_branch
      %339 = sbr.rel (0) target = $region41
    $region40: #{tpu_custom_call.1} parent=1 // pred_region
      %340 = dma.done [#allocation4], 384
    $region41: #{tpu_custom_call.1} parent=1 // pred_fallthru
      _
    %341 = vsyncpa [#allocation3], 1
    %342 = vsyncpa [#allocation6], 1
    %343 = vsyncpa [#allocation4], 1

</llo_original>
